<compile_context>
chip_gen: v7x
topology: tpu7x:2x2x1
jax: 0.10.0
libtpu: 0.0.40
codegen_flags: <defaults>
</compile_context>

<pallas_src>
import functools

import jax
import jax.numpy as jnp
from jax import lax
from jax.experimental import pallas as pl
from jax.experimental.pallas import tpu as pltpu

_LANE = 128
_SUBLANE = 8


def _make_style_kernel(x_ref, o_ref, acc_ref, *, inv_s, lanes_per_tile, n_partial):
    # Grid = (batch_tiles, spatial_tiles); spatial reduction axis is last (innermost).
    k = pl.program_id(1)

    @pl.when(k == 0)
    def _init():
        acc_ref[...] = jnp.zeros_like(acc_ref)

    # Steady state: VPU-only accumulation of static, lane-aligned 128-wide chunks.
    # n_partial independent partial sums break the serial add dependency chain;
    # the cross-lane (XLU) reduce is deferred to the epilogue.
    partials = [None] * n_partial
    for j in range(lanes_per_tile):
        chunk = x_ref[:, :, pl.ds(j * _LANE, _LANE)].astype(jnp.float32)
        p = j % n_partial
        partials[p] = chunk if partials[p] is None else partials[p] + chunk
    tile_sum = partials[0]
    for p in range(1, n_partial):
        if partials[p] is not None:
            tile_sum = tile_sum + partials[p]
    acc_ref[...] += tile_sum

    @pl.when(k == pl.num_programs(1) - 1)
    def _finalize():
        style = jnp.sum(acc_ref[...], axis=-1) * inv_s          # [TB, C] global mean
        sq = jnp.sum(style * style, axis=-1, keepdims=True)     # [TB, 1]
        # rsqrt runs on the EUP; matches style / sqrt(sum(style**2, dim=1)).
        # (Like PyTorch, an all-zero pooled vector yields non-finite output.)
        o_ref[...] = (style * lax.rsqrt(sq)).astype(o_ref.dtype)


def make_style_3d(x: jax.Array,
                  *,
                  vmem_tile_bytes: int = 6 * 1024 * 1024,
                  max_lane_tile: int = 8192) -> jax.Array:
    """x: [B, C, D, H, W] -> [B, C] (L2-normalized global-average-pooled features)."""
    B, C = int(x.shape[0]), int(x.shape[1])
    S = 1
    for d in x.shape[2:]:
        S *= int(d)

    x_flat = x.reshape(B, C, S)

    # Batch tile: a multiple of 8 (sublane rule for the [TB, C] output block) or the
    # full batch dimension.  Multiple batch tiles give v7x a parallel axis to shard.
    if B % _SUBLANE == 0 and B > _SUBLANE:
        TB = _SUBLANE
    else:
        TB = B
    num_b = B // TB

    # Spatial (lane) tile: largest multiple of 128 that fits the per-buffer VMEM budget
    # (accounting for sublane padding of C), capped at the padded extent and at
    # max_lane_tile so the unrolled chunk loop stays a reasonable length.
    itemsize = x.dtype.itemsize
    c_pad = ((C + _SUBLANE - 1) // _SUBLANE) * _SUBLANE
    s_pad128 = ((S + _LANE - 1) // _LANE) * _LANE
    ts_budget = vmem_tile_bytes // max(TB * c_pad * itemsize, 1)
    TS = max(_LANE, (ts_budget // _LANE) * _LANE)
    TS = min(TS, s_pad128, max_lane_tile)
    S_padded = ((S + TS - 1) // TS) * TS
    if S_padded != S:
        # Zero padding does not change the sum; the mean divides by the true S.
        x_flat = jnp.pad(x_flat, ((0, 0), (0, 0), (0, S_padded - S)))
    num_s = S_padded // TS
    lanes_per_tile = TS // _LANE

    # Independent partial accumulators: enough to hide VPU latency when the chunk is
    # only a few vregs (small TB*C); large TB*C already has cross-vreg ILP, so keep
    # live-value pressure low there.
    chunk_vregs = max(1, (TB * c_pad) // _SUBLANE)   # f32 vregs per 128-lane chunk
    if chunk_vregs <= 4:
        n_partial = 4
    elif chunk_vregs <= 8:
        n_partial = 2
    else:
        n_partial = 1
    n_partial = max(1, min(n_partial, lanes_per_tile))

    kernel = functools.partial(
        _make_style_kernel,
        inv_s=1.0 / S,
        lanes_per_tile=lanes_per_tile,
        n_partial=n_partial)

    out = pl.pallas_call(
        kernel,
        out_shape=jax.ShapeDtypeStruct((B, C), x.dtype),
        grid_spec=pltpu.PrefetchScalarGridSpec(
            num_scalar_prefetch=0,
            grid=(num_b, num_s),
            in_specs=[pl.BlockSpec((TB, C, TS), lambda b, k: (b, 0, k))],
            # Same output block for every k -> output stays resident across the
            # reduction axis (accumulator pattern).
            out_specs=pl.BlockSpec((TB, C), lambda b, k: (b, 0)),
            scratch_shapes=[pltpu.VMEM((TB, C, _LANE), jnp.float32)],
        ),
        compiler_params=pltpu.CompilerParams(
            dimension_semantics=("parallel", "arbitrary"),
            vmem_limit_bytes=32 * 1024 * 1024,
        ),
        cost_estimate=pl.CostEstimate(
            flops=B * C * S,
            transcendentals=B,
            bytes_accessed=B * C * S * itemsize + B * C * itemsize,
        ),
    )(x_flat)
    return out


def _reference(x: jax.Array) -> jax.Array:
    style = jnp.mean(x.astype(jnp.float32), axis=(-3, -2, -1))   # [B, C]
    norm = jnp.sum(style ** 2, axis=1, keepdims=True) ** 0.5
    return (style / norm).astype(x.dtype)


if __name__ == "__main__":
    key = jax.random.PRNGKey(0)

    # Small shape consistent with the module (single spatial tile path).
    B, C, D, H, W = 2, 4, 8, 8, 8
    x = jax.random.normal(key, (B, C, D, H, W), dtype=jnp.float32)
    out = make_style_3d(x)
    jax.block_until_ready(out)
    ref = _reference(x)
    assert out.shape == (B, C)
    assert jnp.allclose(out, ref, atol=1e-5, rtol=1e-5), (out, ref)

    # Non-power-of-two spatial extent (S = 2744) -> zero padding to a lane multiple.
    x2 = jax.random.normal(jax.random.PRNGKey(0), (2, 4, 14, 14, 14), dtype=jnp.float32)
    out2 = make_style_3d(x2)
    jax.block_until_ready(out2)
    ref2 = _reference(x2)
    assert jnp.allclose(out2, ref2, atol=1e-5, rtol=1e-5), (out2, ref2)

    # Force the multi-step reduction path (several spatial tiles + padding).
    out3 = make_style_3d(x2, max_lane_tile=1024)
    jax.block_until_ready(out3)
    assert jnp.allclose(out3, ref2, atol=1e-5, rtol=1e-5), (out3, ref2)

    print("KERNEL_OK")
</pallas_src>

<mosaic_0001>
module attributes {stable_mosaic.version = 11 : i64} {
  func.func @_make_style_kernel(%arg0: i32, %arg1: i32, %arg2: memref<2x4x512xf32, #tpu.memory_space<vmem>>, %arg3: memref<2x4xf32, #tpu.memory_space<vmem>>, %arg4: memref<2x4x128xf32, #tpu.memory_space<vmem>>) attributes {dimension_semantics = [#tpu.dimension_semantics<parallel>, #tpu.dimension_semantics<arbitrary>], iteration_bounds = array<i64: 1, 1>, scalar_prefetch = 0 : i64, scratch_operands = 1 : i64, tpu.core_type = #tpu.core_type<tc>, window_params = [{transform_indices = @transform_0, window_bounds = array<i64: 2, 4, 512>}, {transform_indices = @transform_1, window_bounds = array<i64: 2, 4>}]} {
    %c0_i32 = arith.constant 0 : i32
    %0 = arith.cmpi eq, %arg1, %c0_i32 : i32
    %1 = arith.extui %0 : i1 to i32
    %c0_i32_0 = arith.constant 0 : i32
    %2 = arith.cmpi ne, %1, %c0_i32_0 : i32
    scf.if %2 {
      %cst = arith.constant 0.000000e+00 : f32
      %16 = vector.broadcast %cst : f32 to vector<2x4x128xf32>
      %c0_17 = arith.constant 0 : index
      %c0_18 = arith.constant 0 : index
      %c0_19 = arith.constant 0 : index
      %17 = vector.load %arg4[%c0_17, %c0_18, %c0_19] : memref<2x4x128xf32, #tpu.memory_space<vmem>>, vector<2x4x128xf32>
      tpu.vector_store %arg4[%c0_17, %c0_18, %c0_19], %16 {strides = array<i32>} : memref<2x4x128xf32, #tpu.memory_space<vmem>>, vector<2x4x128xf32>,
    } else {
    }
    %c0 = arith.constant 0 : index
    %c0_1 = arith.constant 0 : index
    %c0_2 = arith.constant 0 : index
    %3 = vector.load %arg2[%c0, %c0_1, %c0_2] : memref<2x4x512xf32, #tpu.memory_space<vmem>>, vector<2x4x128xf32>
    %c0_3 = arith.constant 0 : index
    %c0_4 = arith.constant 0 : index
    %c128 = arith.constant 128 : index
    %4 = vector.load %arg2[%c0_3, %c0_4, %c128] : memref<2x4x512xf32, #tpu.memory_space<vmem>>, vector<2x4x128xf32>
    %c0_5 = arith.constant 0 : index
    %c0_6 = arith.constant 0 : index
    %c256 = arith.constant 256 : index
    %5 = vector.load %arg2[%c0_5, %c0_6, %c256] : memref<2x4x512xf32, #tpu.memory_space<vmem>>, vector<2x4x128xf32>
    %c0_7 = arith.constant 0 : index
    %c0_8 = arith.constant 0 : index
    %c384 = arith.constant 384 : index
    %6 = vector.load %arg2[%c0_7, %c0_8, %c384] : memref<2x4x512xf32, #tpu.memory_space<vmem>>, vector<2x4x128xf32>
    %7 = arith.addf %3, %4 : vector<2x4x128xf32>
    %8 = arith.addf %7, %5 : vector<2x4x128xf32>
    %9 = arith.addf %8, %6 : vector<2x4x128xf32>
    %c0_9 = arith.constant 0 : index
    %c0_10 = arith.constant 0 : index
    %c0_11 = arith.constant 0 : index
    %10 = vector.load %arg4[%c0_9, %c0_10, %c0_11] : memref<2x4x128xf32, #tpu.memory_space<vmem>>, vector<2x4x128xf32>
    %11 = arith.addf %10, %9 : vector<2x4x128xf32>
    %c0_12 = arith.constant 0 : index
    %c0_13 = arith.constant 0 : index
    %c0_14 = arith.constant 0 : index
    %12 = vector.load %arg4[%c0_12, %c0_13, %c0_14] : memref<2x4x128xf32, #tpu.memory_space<vmem>>, vector<2x4x128xf32>
    tpu.vector_store %arg4[%c0_12, %c0_13, %c0_14], %11 {strides = array<i32>} : memref<2x4x128xf32, #tpu.memory_space<vmem>>, vector<2x4x128xf32>,
    %c0_i32_15 = arith.constant 0 : i32
    %13 = arith.cmpi eq, %arg1, %c0_i32_15 : i32
    %14 = arith.extui %13 : i1 to i32
    %c0_i32_16 = arith.constant 0 : i32
    %15 = arith.cmpi ne, %14, %c0_i32_16 : i32
    scf.if %15 {
      %c0_17 = arith.constant 0 : index
      %c0_18 = arith.constant 0 : index
      %c0_19 = arith.constant 0 : index
      %16 = vector.load %arg4[%c0_17, %c0_18, %c0_19] : memref<2x4x128xf32, #tpu.memory_space<vmem>>, vector<2x4x128xf32>
      %cst = arith.constant dense<0.000000e+00> : vector<2x4xf32>
      %17 = vector.multi_reduction <add>, %16, %cst [2] : vector<2x4x128xf32> to vector<2x4xf32>
      %cst_20 = arith.constant 0.001953125 : f32
      %18 = vector.broadcast %cst_20 : f32 to vector<2x4xf32>
      %19 = arith.mulf %17, %18 : vector<2x4xf32>
      %20 = arith.mulf %19, %19 : vector<2x4xf32>
      %cst_21 = arith.constant dense<0.000000e+00> : vector<2xf32>
      %21 = vector.multi_reduction <add>, %20, %cst_21 [1] : vector<2x4xf32> to vector<2xf32>
      %22 = vector.shape_cast %21 : vector<2xf32> to vector<2x1xf32>
      %23 = math.rsqrt %22 : vector<2x1xf32>
      %24 = vector.broadcast %23 : vector<2x1xf32> to vector<2x4xf32>
      %25 = arith.mulf %19, %24 : vector<2x4xf32>
      %c0_22 = arith.constant 0 : index
      %c0_23 = arith.constant 0 : index
      %26 = vector.load %arg3[%c0_22, %c0_23] : memref<2x4xf32, #tpu.memory_space<vmem>>, vector<2x4xf32>
      tpu.vector_store %arg3[%c0_22, %c0_23], %25 {strides = array<i32>} : memref<2x4xf32, #tpu.memory_space<vmem>>, vector<2x4xf32>,
    } else {
    }
    return
  }
  func.func @transform_0(%arg0: i32, %arg1: i32) -> (i32, i32, i32) {
    %c0_i32 = arith.constant 0 : i32
    %c0_i32_0 = arith.constant 0 : i32
    return %arg0, %c0_i32, %arg1 : i32, i32, i32
  }
  func.func @transform_1(%arg0: i32, %arg1: i32) -> (i32, i32) {
    %c0_i32 = arith.constant 0 : i32
    %c0_i32_0 = arith.constant 0 : i32
    return %arg0, %c0_i32 : i32, i32
  }
}

</mosaic_0001>

<llo_original>
// kernel: tpu_custom_call.1
$region0: #{tpu_custom_call.1}
  #allocation0 [shape = 'u32[]', space=smem, size = 0x4, offset = 0x4, fixed_abs, tag = 'smem constant byte address 0x4 - core index']
  #allocation1 [shape = 'u32[144,128]{1,0:T(1,128)}', space=vmem, size = 0x12000, scoped, tag = 'internal scratch']
  #allocation2 [shape = 'f32[2,4,128]{2,1,0:T(4,128)}', space=vmem, size = 0x1000, scoped, tag = 'scratch operand']
  %s0 = inlined_call_operand.hbm [shape: f32[2,4,512], index: 0, kind: input, shape index: {}]
  %s1 = inlined_call_operand.hbm [shape: f32[2,4], index: 1, kind: output, shape index: {}]
  %s2 = sld [smem:[#allocation0]]
  $region26: #{tpu_custom_call.1} parent=0
    _
  %s4 = ssub.s32 1, %s2
  %s5 = scalar_select 0, %s4, %s2
  $region1: #{tpu_custom_call.1} parent=0
    #allocation3 [shape = 'u8[16384]{0}', space=vmem, size = 0x4000, scoped, tag = 'input window, operand 0, single buffered']
    #allocation4 [shape = 's32[1]{0}', space=sflag, size = 0x4, scoped, tag = 'scoped memory for tpu_custom_call.1']
    #allocation5 [shape = 's32[1]{0}', space=sflag, size = 0x4, scoped, tag = 'scoped memory for tpu_custom_call.1']
    #allocation6 [shape = 'u8[1024]{0}', space=vmem, size = 0x400, scoped, tag = 'output window, operand 0, single buffered']
    %6 = vsyncpa [#allocation4], 0
    %7 = vsyncpa [#allocation5], 0
    // Predicated region
    $region2: #{tpu_custom_call.1} parent=1 // pred_check
      _
    $region3: #{tpu_custom_call.1} parent=1 // pred_check_branch
      %9 = sbr.rel (0) target = $region5
    $region4: #{tpu_custom_call.1} parent=1 // pred_region
      %s11 = ssub.s32 512, 512
      %12 = vsyncadd [#allocation4], %s11
      %s13 = sshll.u32 [#allocation3], 4
      %s14 = int_to_ptr.vmem [resolvable:$true] %s13
      %19 = dma.hbm_to_vmem [thread:$0]  %s0, 512, %s14, [#allocation4], 256, 256, 16
    $region5: #{tpu_custom_call.1} parent=1 // pred_fallthru
      _
    // Predicated region
    $region6: #{tpu_custom_call.1} parent=1 // pred_check
      _
    $region7: #{tpu_custom_call.1} parent=1 // pred_check_branch
      %21 = sbr.rel (0) target = $region9
    $region8: #{tpu_custom_call.1} parent=1 // pred_region
      %22 = dma.done [#allocation4], 512
    $region9: #{tpu_custom_call.1} parent=1 // pred_fallthru
      _
    %p23 = scmp.eq.s32.totalorder 0, 0
    // Predicated region
    $region10: #{tpu_custom_call.1} parent=1 // pred_check
      %p24 = pneg %p23
    $region11: #{tpu_custom_call.1} parent=1 // pred_check_branch
      %26 = sbr.rel (%p24) target = $region13
    $region12: #{tpu_custom_call.1} parent=1 // pred_region
      %27 = vst [vmem:[#allocation2] sm:$0xf] 0.0
      %28 = vst [vmem:[#allocation2 + $0x4] sm:$0xf] 0.0
    $region13: #{tpu_custom_call.1} parent=1 // pred_fallthru
      _
    %v29 = vld [vmem:[#allocation3] sm:$0xf]
    %v30 = vld [vmem:[#allocation3 + $0x10] sm:$0xf]
    %v31 = vld [vmem:[#allocation3 + $0x4] sm:$0xf]
    %v32 = vld [vmem:[#allocation3 + $0x14] sm:$0xf]
    %v33 = vld [vmem:[#allocation3 + $0x8] sm:$0xf]
    %v34 = vld [vmem:[#allocation3 + $0x18] sm:$0xf]
    %v35 = vld [vmem:[#allocation3 + $0xc] sm:$0xf]
    %v36 = vld [vmem:[#allocation3 + $0x1c] sm:$0xf]
    %v37 = vadd.f32 %v29, %v31
    %v38 = vadd.f32 %v30, %v32
    %v39 = vadd.f32 %v37, %v33
    %v40 = vadd.f32 %v38, %v34
    %v41 = vadd.f32 %v39, %v35
    %v42 = vadd.f32 %v40, %v36
    %v43 = vld [vmem:[#allocation2] sm:$0xf]
    %v44 = vld [vmem:[#allocation2 + $0x4] sm:$0xf]
    %v45 = vadd.f32 %v43, %v41
    %v46 = vadd.f32 %v44, %v42
    %47 = vst [vmem:[#allocation2] sm:$0xf] %v45
    %48 = vst [vmem:[#allocation2 + $0x4] sm:$0xf] %v46
    // Predicated region
    $region14: #{tpu_custom_call.1} parent=1 // pred_check
      %p49 = pneg %p23
    $region15: #{tpu_custom_call.1} parent=1 // pred_check_branch
      %51 = sbr.rel (%p49) target = $region17
    $region16: #{tpu_custom_call.1} parent=1 // pred_region
      %v52 = vld [vmem:[#allocation2] sm:$0xf]
      %v53 = vld [vmem:[#allocation2 + $0x4] sm:$0xf]
      %vm54 = vcmask 1043456
      %v55 = vsel %vm54, %v52, 0.0
      %56 = vadd.xlane.f32.xlu0 %v55
      %v57 = vpop.xlane.xlu0 %56
      %v58 = vsel %vm54, %v53, 0.0
      %59 = vadd.xlane.f32.xlu0 %v58
      %v60 = vpop.xlane.xlu0 %59
      %v61 = vmul.f32 %v57, 0.001953125
      %v62 = vmul.f32 %v60, 0.001953125
      %v63 = vmul.f32 %v61, %v61
      %v64 = vmul.f32 %v62, %v62
      %v67 = vlaneseq
      %v68 = vand.u32 %v67, 127
      %v69 = vlaneseq
      %v70 = vshrl.u32 %v69, 7
      %v71 = vsub.s32 %v68, %v70
      %v72 = vrot.slane %v63, %v71
      %v73 = vlaneseq
      %v74 = vshrl.u32 %v73, 7
      %v75 = vsub.s32 %v68, %v74
      %v76 = vrot.slane %v64, %v75
      %vm77 = vcmask 1041409
      %v78 = vsel %vm77, %v76, %v72
      %vm80 = vcmask 25600
      %v81 = vsel %vm80, %v78, 0.0
      %82 = vadd.xlane.f32.xlu0 %v81
      %v83 = vpop.xlane.xlu0 %82
      %v84 = vrsqrt.pop %v83
      %v86 = vlaneseq
      %v87 = vshrl.u32 %v86, 7
      %v88 = vsub.s32 0, %v87
      %v89 = vrot.slane %v84, %v88
      %v90 = vlaneseq
      %v91 = vshrl.u32 %v90, 7
      %v92 = vsub.s32 1, %v91
      %v93 = vrot.slane %v84, %v92
      %v96 = vmul.f32 %v61, %v89
      %v97 = vmul.f32 %v62, %v93
      %100 = vset.pattern.permute.xlu0 0
      %101 = vperm.xlu0 %100, %v96
      %v102 = vpop.permute.xlu0 %101
      %103 = vset.pattern.permute.xlu0 0
      %104 = vperm.xlu0 %103, %v97
      %v105 = vpop.permute.xlu0 %104
      %v106 = vlaneseq
      %v107 = vshrl.u32 %v106, 7
      %v108 = vsub.s32 %v68, %v107
      %v109 = vrot.slane %v102, %v108
      %v110 = vlaneseq
      %v111 = vshrl.u32 %v110, 7
      %v112 = vsub.s32 %v68, %v111
      %v113 = vrot.slane %v105, %v112
      %v114 = vsel %vm77, %v113, %v109
      %116 = vst.msk [vmem:[#allocation6] sm:$0x3] %vm80, %v114
    $region17: #{tpu_custom_call.1} parent=1 // pred_fallthru
      _
    // Predicated region
    $region18: #{tpu_custom_call.1} parent=1 // pred_check
      _
    $region19: #{tpu_custom_call.1} parent=1 // pred_check_branch
      %118 = sbr.rel (0) target = $region21
    $region20: #{tpu_custom_call.1} parent=1 // pred_region
      %s120 = ssub.s32 32, 32
      %121 = vsyncadd [#allocation5], %s120
      %s123 = sshll.u32 [#allocation6], 4
      %s124 = int_to_ptr.vmem [resolvable:$true] %s123
      %126 = dma.vmem_to_hbm [thread:$0]  %s124, 32, %s1, [#allocation5]
    $region21: #{tpu_custom_call.1} parent=1 // pred_fallthru
      _
    // Predicated region
    $region22: #{tpu_custom_call.1} parent=1 // pred_check
      _
    $region23: #{tpu_custom_call.1} parent=1 // pred_check_branch
      %128 = sbr.rel (0) target = $region25
    $region24: #{tpu_custom_call.1} parent=1 // pred_region
      %129 = dma.done [#allocation5], 32
    $region25: #{tpu_custom_call.1} parent=1 // pred_fallthru
      _
    %130 = vsyncpa [#allocation4], 1
    %131 = vsyncpa [#allocation5], 1

</llo_original>
